<compile_context>
chip_gen: v6e
topology: v6e:2x2x1
jax: 0.10.0
libtpu: 0.0.40
codegen_flags: <defaults>
</compile_context>

<pallas_src>
import functools

import jax
import jax.numpy as jnp
from jax import lax
from jax.experimental import pallas as pl
from jax.experimental.pallas import tpu as pltpu


# ----------------------------------------------------------------------------
# Fused kernel: conv-as-matmul (+folded BN scale) -> +BN bias -> ReLU
#               -> global avg pool -> FC head.  Everything stays in VMEM.
#   patches: (M, Kp) bf16   w: (Kp, Cp) bf16   fcw: (Cp, NCLSP) bf16
#   bias:    (2, Cp) f32  [row 0 = BN bias, row 1 = FC bias]
#   out:     (N, NCLSP) f32
# ----------------------------------------------------------------------------
def fused_model_kernel(p_ref, w_ref, fcw_ref, bias_ref, o_ref, *, n, s):
    # Conv as matmul: bf16 operands, f32 MXU accumulation.
    feat = jnp.dot(p_ref[...], w_ref[...],
                   preferred_element_type=jnp.float32)        # (M, Cp) f32
    bias = bias_ref[...]                                       # (2, Cp) f32
    feat = jnp.maximum(feat + bias[0:1, :], 0.0)               # BN bias + ReLU (f32 VPU)
    # Global average pool: (n*s, Cp) -> (n, s, Cp), f32 sum over s, scale by 1/s.
    pooled = jnp.sum(feat.reshape(n, s, feat.shape[-1]), axis=1) * (1.0 / s)  # (n, Cp)
    # Classifier head: bf16 operands, f32 accumulation.
    logits = jnp.dot(pooled.astype(jnp.bfloat16), fcw_ref[...],
                     preferred_element_type=jnp.float32)       # (n, NCLSP)
    o_ref[...] = (logits + bias[1:2, :]).astype(o_ref.dtype)


def fused_forward_call(patches, w_pad, fcw_pad, bias, *, n, s):
    M, Kp = patches.shape
    Cp = w_pad.shape[1]
    NCLSP = fcw_pad.shape[1]

    flops = 2 * M * Kp * Cp + M * Cp + 2 * n * Cp * NCLSP
    bytes_accessed = (M * Kp * 2 + Kp * Cp * 2 + Cp * NCLSP * 2   # bf16 operands
                      + 2 * Cp * 4 + n * NCLSP * 4)               # f32 bias / output

    kernel = functools.partial(fused_model_kernel, n=n, s=s)

    # Tiny workload -> single whole-array block, no grid (a grid would be pure
    # sequential per-step overhead on TPU at this size).
    return pl.pallas_call(
        kernel,
        out_shape=jax.ShapeDtypeStruct((n, NCLSP), jnp.float32),
        in_specs=[
            pl.BlockSpec((M, Kp), lambda: (0, 0)),
            pl.BlockSpec((Kp, Cp), lambda: (0, 0)),
            pl.BlockSpec((Cp, NCLSP), lambda: (0, 0)),
            pl.BlockSpec((2, Cp), lambda: (0, 0)),
        ],
        out_specs=pl.BlockSpec((n, NCLSP), lambda: (0, 0)),
        compiler_params=pltpu.CompilerParams(vmem_limit_bytes=64 << 20),
        cost_estimate=pl.CostEstimate(
            flops=flops, transcendentals=0, bytes_accessed=bytes_accessed),
    )(patches, w_pad, fcw_pad, bias)


# ----------------------------------------------------------------------------
# Wrapper: weight prep (BN folding, lane-dense padding) + fused XLA im2col.
# ----------------------------------------------------------------------------
@jax.jit
def temp_forward(x_nchw, params):
    conv_w = params["conv_w"]          # (Cout, Cin, KH, KW) — PyTorch layout
    bn_scale = params["bn_scale"]      # (Cout,)
    bn_bias = params["bn_bias"]        # (Cout,)
    fc_w = params["fc_w"]              # (num_classes, Cout) — PyTorch layout
    fc_b = params["fc_b"]              # (num_classes,)

    Cout, Cin, KH, KW = conv_w.shape
    ncls = fc_w.shape[0]
    N, _, H, W = x_nchw.shape
    stride, pad = 2, 1
    OH = (H + 2 * pad - KH) // stride + 1
    OW = (W + 2 * pad - KW) // stride + 1
    S = OH * OW
    M = N * S
    K = Cin * KH * KW                  # 27
    Kp = 32                            # reduction dim zero-padded 27 -> 32
    Cp = 128                           # Cout padded 16 -> 128 (lane-dense feat)
    NCLSP = 128                        # classes padded 10 -> 128 (lane-dense store)

    # im2col in one fused XLA op; feature dim ordered (Cin, KH, KW), channels last.
    patches = lax.conv_general_dilated_patches(
        x_nchw.astype(jnp.float32), filter_shape=(KH, KW),
        window_strides=(stride, stride), padding=((pad, pad), (pad, pad)),
        dimension_numbers=("NCHW", "OIHW", "NHWC"),
    ).reshape(M, K)                                               # (M, 27)
    patches = jnp.pad(patches, ((0, 0), (0, Kp - K)))             # (M, 32)

    # Fold BN scale into the conv weight; zero-pad to (Kp, Cp).
    # conv_w (Cout, Cin, KH, KW) flattens as (Cin, KH, KW) -> matches patches.
    w_mat = conv_w.reshape(Cout, K).T * bn_scale[None, :]         # (27, Cout)
    w_pad = jnp.pad(w_mat, ((0, Kp - K), (0, Cp - Cout)))         # (32, 128)

    # FC weight, transposed and zero-padded to lane-dense (Cp, NCLSP).
    fcw_pad = jnp.pad(jnp.transpose(fc_w, (1, 0)),
                      ((0, Cp - Cout), (0, NCLSP - ncls)))        # (128, 128)

    # BN bias + FC bias ride together in one small f32 ref (one DMA).
    bias = jnp.stack([jnp.pad(bn_bias, (0, Cp - Cout)),
                      jnp.pad(fc_b, (0, NCLSP - ncls))], axis=0)  # (2, 128)

    logits_pad = fused_forward_call(
        patches.astype(jnp.bfloat16),     # bf16 MXU operands, f32 accumulation
        w_pad.astype(jnp.bfloat16),
        fcw_pad.astype(jnp.bfloat16),
        bias.astype(jnp.float32),
        n=N, s=S,
    )                                                             # (N, 128)
    return logits_pad[:, :ncls]                                   # (N, 10)


# ----------------------------------------------------------------------------
# Pure-JAX reference (sanity check against the Pallas path)
# ----------------------------------------------------------------------------
def reference_forward(x_nchw, params):
    conv_w = params["conv_w"]
    y = jax.lax.conv_general_dilated(
        x_nchw.astype(jnp.float32), conv_w.astype(jnp.float32),
        window_strides=(2, 2), padding=((1, 1), (1, 1)),
        dimension_numbers=("NCHW", "OIHW", "NCHW"),
    )                                                             # (N, Cout, OH, OW)
    y = y * params["bn_scale"][None, :, None, None] + params["bn_bias"][None, :, None, None]
    y = jnp.maximum(y, 0.0)
    pooled = jnp.mean(y, axis=(2, 3))                             # (N, Cout)
    return pooled @ params["fc_w"].T + params["fc_b"]


def make_params(key):
    Cin, Cout, KH, KW, NCLS = 3, 16, 3, 3, 10
    k1, k2, k3, k4, k5 = jax.random.split(key, 5)
    conv_w = jax.random.normal(k1, (Cout, Cin, KH, KW), jnp.float32) * 0.1
    # Folded inference BatchNorm: scale = gamma/sqrt(var+eps), bias = beta - mean*scale
    gamma = jnp.abs(jax.random.normal(k2, (Cout,), jnp.float32)) + 0.5
    beta = jax.random.normal(k3, (Cout,), jnp.float32) * 0.1
    run_mean = jax.random.normal(k4, (Cout,), jnp.float32) * 0.1
    run_var = jnp.abs(jax.random.normal(k5, (Cout,), jnp.float32)) + 1.0
    eps = 1e-5
    bn_scale = gamma / jnp.sqrt(run_var + eps)
    bn_bias = beta - run_mean * bn_scale
    k6, k7 = jax.random.split(k1, 2)
    fc_w = jax.random.normal(k6, (NCLS, Cout), jnp.float32) * 0.1
    fc_b = jax.random.normal(k7, (NCLS,), jnp.float32) * 0.01
    return {
        "conv_w": conv_w, "bn_scale": bn_scale, "bn_bias": bn_bias,
        "fc_w": fc_w, "fc_b": fc_b,
    }


if __name__ == "__main__":
    key = jax.random.PRNGKey(0)
    kx, kp = jax.random.split(key)
    # Input consistent with an image classifier: NCHW (batch=2, channels=3, 16x16)
    x = jax.random.normal(kx, (2, 3, 16, 16), jnp.float32)
    params = make_params(kp)

    out = temp_forward(x, params)
    out = jax.block_until_ready(out)

    ref = reference_forward(x, params)
    assert out.shape == (2, 10)
    # bf16 MXU operands (f32 accumulation, f32 biases) -> relaxed tolerance vs
    # the all-f32 reference.
    assert jnp.allclose(out, ref, atol=5e-2, rtol=1e-1), "Pallas output mismatch vs reference"

    print("KERNEL_OK")
</pallas_src>

<mosaic_0001>
module attributes {stable_mosaic.version = 11 : i64} {
  func.func @fused_model_kernel(%arg0: memref<128x32xbf16, #tpu.memory_space<vmem>>, %arg1: memref<32x128xbf16, #tpu.memory_space<vmem>>, %arg2: memref<128x128xbf16, #tpu.memory_space<vmem>>, %arg3: memref<2x128xf32, #tpu.memory_space<vmem>>, %arg4: memref<2x128xf32, #tpu.memory_space<vmem>>) attributes {dimension_semantics = [], scalar_prefetch = 0 : i64, scratch_operands = 0 : i64, tpu.core_type = #tpu.core_type<tc>} {
    %c0 = arith.constant 0 : index
    %c0_0 = arith.constant 0 : index
    %0 = vector.load %arg0[%c0, %c0_0] : memref<128x32xbf16, #tpu.memory_space<vmem>>, vector<128x32xbf16>
    %c0_1 = arith.constant 0 : index
    %c0_2 = arith.constant 0 : index
    %1 = vector.load %arg1[%c0_1, %c0_2] : memref<32x128xbf16, #tpu.memory_space<vmem>>, vector<32x128xbf16>
    %cst = arith.constant dense<0.000000e+00> : vector<128x128xf32>
    %2 = tpu.matmul %0, %1, %cst {dimension_numbers = #tpu.dot_dimension_numbers<[1], [0], [0], [1], [0, 0, 1, 1], [], []>} : vector<128x32xbf16>, vector<32x128xbf16>, vector<128x128xf32> -> vector<128x128xf32>
    %c0_3 = arith.constant 0 : index
    %c0_4 = arith.constant 0 : index
    %3 = vector.load %arg3[%c0_3, %c0_4] : memref<2x128xf32, #tpu.memory_space<vmem>>, vector<2x128xf32>
    %4 = vector.extract_strided_slice %3 {offsets = [0, 0], sizes = [1, 128], strides = [1, 1]} : vector<2x128xf32> to vector<1x128xf32>
    %5 = vector.broadcast %4 : vector<1x128xf32> to vector<128x128xf32>
    %6 = arith.addf %2, %5 : vector<128x128xf32>
    %cst_5 = arith.constant 0.000000e+00 : f32
    %7 = vector.broadcast %cst_5 : f32 to vector<128x128xf32>
    %8 = arith.maximumf %6, %7 : vector<128x128xf32>
    %9 = vector.shape_cast %8 : vector<128x128xf32> to vector<2x64x128xf32>
    %cst_6 = arith.constant dense<0.000000e+00> : vector<2x128xf32>
    %10 = vector.multi_reduction <add>, %9, %cst_6 [1] : vector<2x64x128xf32> to vector<2x128xf32>
    %cst_7 = arith.constant 1.562500e-02 : f32
    %11 = vector.broadcast %cst_7 : f32 to vector<2x128xf32>
    %12 = arith.mulf %10, %11 : vector<2x128xf32>
    %13 = arith.truncf %12 : vector<2x128xf32> to vector<2x128xbf16>
    %c0_8 = arith.constant 0 : index
    %c0_9 = arith.constant 0 : index
    %14 = vector.load %arg2[%c0_8, %c0_9] : memref<128x128xbf16, #tpu.memory_space<vmem>>, vector<128x128xbf16>
    %cst_10 = arith.constant dense<0.000000e+00> : vector<2x128xf32>
    %15 = tpu.matmul %13, %14, %cst_10 {dimension_numbers = #tpu.dot_dimension_numbers<[1], [0], [0], [1], [0, 0, 1, 1], [], []>} : vector<2x128xbf16>, vector<128x128xbf16>, vector<2x128xf32> -> vector<2x128xf32>
    %16 = vector.extract_strided_slice %3 {offsets = [1, 0], sizes = [1, 128], strides = [1, 1]} : vector<2x128xf32> to vector<1x128xf32>
    %17 = vector.broadcast %16 : vector<1x128xf32> to vector<2x128xf32>
    %18 = arith.addf %15, %17 : vector<2x128xf32>
    %c0_11 = arith.constant 0 : index
    %c0_12 = arith.constant 0 : index
    %19 = vector.load %arg4[%c0_11, %c0_12] : memref<2x128xf32, #tpu.memory_space<vmem>>, vector<2x128xf32>
    tpu.vector_store %arg4[%c0_11, %c0_12], %18 {strides = array<i32>} : memref<2x128xf32, #tpu.memory_space<vmem>>, vector<2x128xf32>,
    return
  }
}

</mosaic_0001>

<llo_original>
// kernel: temp_forward.1
$region0: #{temp_forward.1}
  #allocation0 [shape = 'u32[]', space=smem, size = 0x4, offset = 0x4, fixed_abs, tag = 'smem constant byte address 0x4 - core index']
  #allocation1 [shape = 'u32[144,128]{1,0:T(1,128)}', space=vmem, size = 0x12000, scoped, tag = 'internal scratch']
  %s0 = inlined_call_operand.vmem [shape: bf16[128,32], index: 0, kind: input, shape index: {}]
  %s1 = inlined_call_operand.vmem [shape: bf16[32,128], index: 1, kind: input, shape index: {}]
  %s2 = inlined_call_operand.vmem [shape: bf16[128,128], index: 2, kind: input, shape index: {}]
  %s3 = inlined_call_operand.vmem [shape: f32[2,128], index: 3, kind: input, shape index: {}]
  %s4 = inlined_call_operand.hbm [shape: f32[2,128], index: 4, kind: output, shape index: {}]
  %s5 = sld [smem:[#allocation0]]
  $region26: #{temp_forward.1} parent=0
    _
  %s7 = ssub.s32 1, %s5
  %s8 = scalar_select 0, %s7, %s5
  $region1: #{temp_forward.1} parent=0
    #allocation2 [shape = 'u8[1024]{0}', space=vmem, size = 0x400, scoped, tag = 'output window, operand 0, single buffered']
    #allocation3 [shape = 's32[1]{0}', space=sflag, size = 0x4, scoped, tag = 'scoped memory for temp_forward.1']
    %9 = vsyncpa [#allocation3], 0
    // Predicated region
    $region2: #{temp_forward.1} parent=1 // pred_check
      _
    $region3: #{temp_forward.1} parent=1 // pred_check_branch
      %11 = sbr.rel (0) target = $region5
    $region4: #{temp_forward.1} parent=1 // pred_region
      _
    $region5: #{temp_forward.1} parent=1 // pred_fallthru
      _
    // Predicated region
    $region6: #{temp_forward.1} parent=1 // pred_check
      _
    $region7: #{temp_forward.1} parent=1 // pred_check_branch
      %13 = sbr.rel (0) target = $region9
    $region8: #{temp_forward.1} parent=1 // pred_region
      _
    $region9: #{temp_forward.1} parent=1 // pred_fallthru
      _
    // Predicated region
    $region10: #{temp_forward.1} parent=1 // pred_check
      _
    $region11: #{temp_forward.1} parent=1 // pred_check_branch
      %15 = sbr.rel (0) target = $region13
    $region12: #{temp_forward.1} parent=1 // pred_region
      _
    $region13: #{temp_forward.1} parent=1 // pred_fallthru
      _
    // Predicated region
    $region14: #{temp_forward.1} parent=1 // pred_check
      _
    $region15: #{temp_forward.1} parent=1 // pred_check_branch
      %17 = sbr.rel (0) target = $region17
    $region16: #{temp_forward.1} parent=1 // pred_region
      _
    $region17: #{temp_forward.1} parent=1 // pred_fallthru
      _
    %v19 = vld [vmem:[%s0] sm:$0xf]
    %v20 = vld [vmem:[%s0 + $0x4] sm:$0xf]
    %v21 = vld [vmem:[%s0 + $0x8] sm:$0xf]
    %v22 = vld [vmem:[%s0 + $0xc] sm:$0xf]
    %v23 = vld [vmem:[%s0 + $0x10] sm:$0xf]
    %v24 = vld [vmem:[%s0 + $0x14] sm:$0xf]
    %v25 = vld [vmem:[%s0 + $0x18] sm:$0xf]
    %v26 = vld [vmem:[%s0 + $0x1c] sm:$0xf]
    %v27 = vld [vmem:[%s0 + $0x20] sm:$0xf]
    %v28 = vld [vmem:[%s0 + $0x24] sm:$0xf]
    %v29 = vld [vmem:[%s0 + $0x28] sm:$0xf]
    %v30 = vld [vmem:[%s0 + $0x2c] sm:$0xf]
    %v31 = vld [vmem:[%s0 + $0x30] sm:$0xf]
    %v32 = vld [vmem:[%s0 + $0x34] sm:$0xf]
    %v33 = vld [vmem:[%s0 + $0x38] sm:$0xf]
    %v34 = vld [vmem:[%s0 + $0x3c] sm:$0xf]
    %v35 = vld [vmem:[%s1] sm:$0xf]
    %v36 = vld [vmem:[%s1 + $0x4] sm:$0xf]
    %v37 = vld [vmem:[%s1 + $0x8] sm:$0xf]
    %v38 = vld [vmem:[%s1 + $0xc] sm:$0xf]
    %v39 = vld [vmem:[%s3] sm:$0x3]
    %v40 = vlaneseq
    %v41 = vshrl.u32 %v40, 7
    %v42 = vsub.s32 0, %v41
    %v43 = vrot.slane %v39, %v42
    %v60 = vunpack.c.l.b16 %v19
    %v61 = vunpack.c.l.b16 %v20
    %v62 = vunpack.c.l.b16 %v21
    %v63 = vunpack.c.l.b16 %v22
    %v64 = vunpack.c.l.b16 %v23
    %v65 = vunpack.c.l.b16 %v24
    %v66 = vunpack.c.l.b16 %v25
    %v67 = vunpack.c.l.b16 %v26
    %v68 = vunpack.c.l.b16 %v27
    %v69 = vunpack.c.l.b16 %v28
    %v70 = vunpack.c.l.b16 %v29
    %v71 = vunpack.c.l.b16 %v30
    %v72 = vunpack.c.l.b16 %v31
    %v73 = vunpack.c.l.b16 %v32
    %v74 = vunpack.c.l.b16 %v33
    %v75 = vunpack.c.l.b16 %v34
    %v76 = vpack.c.b16 %v61, %v60
    %v77 = vpack.c.b16 %v63, %v62
    %v78 = vpack.c.b16 %v65, %v64
    %v79 = vpack.c.b16 %v67, %v66
    %v80 = vpack.c.b16 %v69, %v68
    %v81 = vpack.c.b16 %v71, %v70
    %v82 = vpack.c.b16 %v73, %v72
    %v83 = vpack.c.b16 %v75, %v74
    %v88 = vunpack.c.l.b16 %v35
    %v89 = vunpack.c.l.b16 %v36
    %v90 = vunpack.c.l.b16 %v37
    %v91 = vunpack.c.l.b16 %v38
    %v92 = vpack.c.b16 %v89, %v88
    %v93 = vpack.c.b16 %v91, %v90
    %vm96 = vcmask 261120
    %v98 = vsel %vm96, %v76, 0
    %v101 = vsel %vm96, %v77, 0
    %v104 = vsel %vm96, %v78, 0
    %v107 = vsel %vm96, %v79, 0
    %v110 = vsel %vm96, %v80, 0
    %v113 = vsel %vm96, %v81, 0
    %v116 = vsel %vm96, %v82, 0
    %v119 = vsel %vm96, %v83, 0
    %121 = vmatprep.subr.bf16.mxu0 0
    %122 = vmatpush1.bf16.msra.mxu0 0
    %123 = vmatprep.subr.bf16.mxu0 0
    %124 = vmatpush1.bf16.msra.mxu0 0
    %125 = vmatprep.subr.bf16.mxu0 0
    %126 = vmatpush1.bf16.msra.mxu0 0
    %127 = vmatprep.subr.bf16.mxu0 0
    %128 = vmatpush1.bf16.msra.mxu0 0
    %129 = vmatprep.subr.bf16.mxu0 0
    %130 = vmatpush1.bf16.msra.mxu0 0
    %131 = vmatprep.subr.bf16.mxu0 0
    %132 = vmatpush1.bf16.msra.mxu0 0
    %133 = vmatprep.subr.bf16.mxu0 0
    %134 = vmatpush1.bf16.msra.mxu0 %v93
    %135 = vmatprep.subr.bf16.mxu0 0
    %136 = vmatpush1.bf16.msra.mxu0 %v92
    %137 = vmatprep.subr.bf16.mxu0 0
    %138 = vmatpush2.bf16.msra.mxu0 0
    %139 = vmatprep.subr.bf16.mxu0 0
    %140 = vmatpush2.bf16.msra.mxu0 0
    %141 = vmatprep.subr.bf16.mxu0 0
    %142 = vmatpush2.bf16.msra.mxu0 0
    %143 = vmatprep.subr.bf16.mxu0 0
    %144 = vmatpush2.bf16.msra.mxu0 0
    %145 = vmatprep.subr.bf16.mxu0 0
    %146 = vmatpush2.bf16.msra.mxu0 0
    %147 = vmatprep.subr.bf16.mxu0 0
    %148 = vmatpush2.bf16.msra.mxu0 0
    %149 = vmatprep.subr.bf16.mxu0 0
    %150 = vmatpush2.bf16.msra.mxu0 0
    %151 = vmatprep.subr.bf16.mxu0 0
    %152 = vmatpush2.bf16.msra.mxu0 0
    %153 = vmatprep.mubr.bf16.mxu0 0
    %154 = vmatmul.mubr.bf16.gmra.mxu0 %v98
    %v155 = vpop.f32.mrf.mxu0
    %v156 = vadd.f32 %v43, %v155
    %v157 = vpop.f32.mrf.mxu0
    %v158 = vpop.f32.mrf.mxu0
    %v159 = vadd.f32 %v43, %v158
    %v160 = vpop.f32.mrf.mxu0
    %161 = vmatprep.mubr.bf16.mxu0 0
    %162 = vmatmul.mubr.bf16.gmra.mxu0 %v101
    %v163 = vpop.f32.mrf.mxu0
    %v164 = vadd.f32 %v43, %v163
    %v165 = vpop.f32.mrf.mxu0
    %v166 = vpop.f32.mrf.mxu0
    %v167 = vadd.f32 %v43, %v166
    %v168 = vpop.f32.mrf.mxu0
    %169 = vmatprep.mubr.bf16.mxu0 0
    %170 = vmatmul.mubr.bf16.gmra.mxu0 %v104
    %v171 = vpop.f32.mrf.mxu0
    %v172 = vadd.f32 %v43, %v171
    %v173 = vpop.f32.mrf.mxu0
    %v174 = vpop.f32.mrf.mxu0
    %v175 = vadd.f32 %v43, %v174
    %v176 = vpop.f32.mrf.mxu0
    %177 = vmatprep.mubr.bf16.mxu0 0
    %178 = vmatmul.mubr.bf16.gmra.mxu0 %v107
    %v179 = vpop.f32.mrf.mxu0
    %v180 = vadd.f32 %v43, %v179
    %v181 = vpop.f32.mrf.mxu0
    %v182 = vpop.f32.mrf.mxu0
    %v183 = vadd.f32 %v43, %v182
    %v184 = vpop.f32.mrf.mxu0
    %185 = vmatprep.mubr.bf16.mxu0 0
    %186 = vmatmul.mubr.bf16.gmra.mxu0 %v110
    %v187 = vpop.f32.mrf.mxu0
    %v188 = vadd.f32 %v43, %v187
    %v189 = vpop.f32.mrf.mxu0
    %v190 = vpop.f32.mrf.mxu0
    %v191 = vadd.f32 %v43, %v190
    %v192 = vpop.f32.mrf.mxu0
    %193 = vmatprep.mubr.bf16.mxu0 0
    %194 = vmatmul.mubr.bf16.gmra.mxu0 %v113
    %v195 = vpop.f32.mrf.mxu0
    %v196 = vadd.f32 %v43, %v195
    %v197 = vpop.f32.mrf.mxu0
    %v198 = vpop.f32.mrf.mxu0
    %v199 = vadd.f32 %v43, %v198
    %v200 = vpop.f32.mrf.mxu0
    %201 = vmatprep.mubr.bf16.mxu0 0
    %202 = vmatmul.mubr.bf16.gmra.mxu0 %v116
    %v203 = vpop.f32.mrf.mxu0
    %v204 = vadd.f32 %v43, %v203
    %v205 = vpop.f32.mrf.mxu0
    %v206 = vpop.f32.mrf.mxu0
    %v207 = vadd.f32 %v43, %v206
    %v208 = vpop.f32.mrf.mxu0
    %209 = vmatprep.mubr.bf16.mxu0 0
    %210 = vmatmul.mubr.bf16.gmra.mxu0 %v119
    %v211 = vpop.f32.mrf.mxu0
    %v212 = vadd.f32 %v43, %v211
    %v213 = vpop.f32.mrf.mxu0
    %v214 = vpop.f32.mrf.mxu0
    %v215 = vadd.f32 %v43, %v214
    %v216 = vpop.f32.mrf.mxu0
    %217 = vdwg.mxu0
    %v218 = vmax.f32 %v156, 0.0
    %v219 = vmax.f32 %v159, 0.0
    %v220 = vmax.f32 %v164, 0.0
    %v221 = vmax.f32 %v167, 0.0
    %v222 = vmax.f32 %v172, 0.0
    %v223 = vmax.f32 %v175, 0.0
    %v224 = vmax.f32 %v180, 0.0
    %v225 = vmax.f32 %v183, 0.0
    %v226 = vmax.f32 %v188, 0.0
    %v227 = vmax.f32 %v191, 0.0
    %v228 = vmax.f32 %v196, 0.0
    %v229 = vmax.f32 %v199, 0.0
    %v230 = vmax.f32 %v204, 0.0
    %v231 = vmax.f32 %v207, 0.0
    %v232 = vmax.f32 %v212, 0.0
    %v233 = vmax.f32 %v215, 0.0
    %v234 = vadd.f32 %v218, %v219
    %v235 = vadd.f32 %v234, %v220
    %v236 = vadd.f32 %v235, %v221
    %v237 = vadd.f32 %v236, %v222
    %v238 = vadd.f32 %v237, %v223
    %v239 = vadd.f32 %v238, %v224
    %v240 = vadd.f32 %v239, %v225
    %v241 = vrot.slane %v240, 4
    %v242 = vadd.f32 %v240, %v241
    %v243 = vrot.slane %v242, 2
    %v244 = vadd.f32 %v242, %v243
    %v245 = vrot.slane %v244, 1
    %v246 = vadd.f32 %v244, %v245
    %v247 = vadd.f32 %v226, %v227
    %v248 = vadd.f32 %v247, %v228
    %v249 = vadd.f32 %v248, %v229
    %v250 = vadd.f32 %v249, %v230
    %v251 = vadd.f32 %v250, %v231
    %v252 = vadd.f32 %v251, %v232
    %v253 = vadd.f32 %v252, %v233
    %v254 = vrot.slane %v253, 4
    %v255 = vadd.f32 %v253, %v254
    %v256 = vrot.slane %v255, 2
    %v257 = vadd.f32 %v255, %v256
    %v258 = vrot.slane %v257, 1
    %v259 = vadd.f32 %v257, %v258
    %v260 = vmul.f32 %v246, 0.015625
    %v261 = vmul.f32 %v259, 0.015625
    %v262 = vpack.c.bf16 %v260, %v260
    %v263 = vpack.c.bf16 %v261, %v261
    %v264 = vld [vmem:[%s2] sm:$0xf]
    %v265 = vld [vmem:[%s2 + $0x4] sm:$0xf]
    %v266 = vld [vmem:[%s2 + $0x8] sm:$0xf]
    %v267 = vld [vmem:[%s2 + $0xc] sm:$0xf]
    %v268 = vld [vmem:[%s2 + $0x10] sm:$0xf]
    %v269 = vld [vmem:[%s2 + $0x14] sm:$0xf]
    %v270 = vld [vmem:[%s2 + $0x18] sm:$0xf]
    %v271 = vld [vmem:[%s2 + $0x1c] sm:$0xf]
    %v272 = vld [vmem:[%s2 + $0x20] sm:$0xf]
    %v273 = vld [vmem:[%s2 + $0x24] sm:$0xf]
    %v274 = vld [vmem:[%s2 + $0x28] sm:$0xf]
    %v275 = vld [vmem:[%s2 + $0x2c] sm:$0xf]
    %v276 = vld [vmem:[%s2 + $0x30] sm:$0xf]
    %v277 = vld [vmem:[%s2 + $0x34] sm:$0xf]
    %v278 = vld [vmem:[%s2 + $0x38] sm:$0xf]
    %v279 = vld [vmem:[%s2 + $0x3c] sm:$0xf]
    %v280 = vlaneseq
    %v281 = vshrl.u32 %v280, 7
    %v282 = vsub.s32 1, %v281
    %v283 = vrot.slane %v39, %v282
    %v286 = vunpack.c.l.b16 %v262
    %v287 = vunpack.c.l.b16 %v263
    %vm288 = vcmask 1041409
    %v289 = vsel %vm288, %v287, %v286
    %v290 = vpack.c.b16 %v289, %v289
    %v308 = vunpack.c.l.b16 %v264
    %v309 = vunpack.c.l.b16 %v265
    %v310 = vunpack.c.l.b16 %v266
    %v311 = vunpack.c.l.b16 %v267
    %v312 = vunpack.c.l.b16 %v268
    %v313 = vunpack.c.l.b16 %v269
    %v314 = vunpack.c.l.b16 %v270
    %v315 = vunpack.c.l.b16 %v271
    %v316 = vunpack.c.l.b16 %v272
    %v317 = vunpack.c.l.b16 %v273
    %v318 = vunpack.c.l.b16 %v274
    %v319 = vunpack.c.l.b16 %v275
    %v320 = vunpack.c.l.b16 %v276
    %v321 = vunpack.c.l.b16 %v277
    %v322 = vunpack.c.l.b16 %v278
    %v323 = vunpack.c.l.b16 %v279
    %v324 = vpack.c.b16 %v309, %v308
    %v325 = vpack.c.b16 %v311, %v310
    %v326 = vpack.c.b16 %v313, %v312
    %v327 = vpack.c.b16 %v315, %v314
    %v328 = vpack.c.b16 %v317, %v316
    %v329 = vpack.c.b16 %v319, %v318
    %v330 = vpack.c.b16 %v321, %v320
    %v331 = vpack.c.b16 %v323, %v322
    %340 = vmatprep.subr.bf16.mxu0 0
    %341 = vmatpush1.bf16.msra.mxu0 %v331
    %342 = vmatprep.subr.bf16.mxu0 0
    %343 = vmatpush1.bf16.msra.mxu0 %v330
    %344 = vmatprep.subr.bf16.mxu0 0
    %345 = vmatpush1.bf16.msra.mxu0 %v329
    %346 = vmatprep.subr.bf16.mxu0 0
    %347 = vmatpush1.bf16.msra.mxu0 %v328
    %348 = vmatprep.subr.bf16.mxu0 0
    %349 = vmatpush1.bf16.msra.mxu0 %v327
    %350 = vmatprep.subr.bf16.mxu0 0
    %351 = vmatpush1.bf16.msra.mxu0 %v326
    %352 = vmatprep.subr.bf16.mxu0 0
    %353 = vmatpush1.bf16.msra.mxu0 %v325
    %354 = vmatprep.subr.bf16.mxu0 0
    %355 = vmatpush1.bf16.msra.mxu0 %v324
    %356 = vmatprep.subr.bf16.mxu0 0
    %357 = vmatpush2.bf16.msra.mxu0 0
    %358 = vmatprep.subr.bf16.mxu0 0
    %359 = vmatpush2.bf16.msra.mxu0 0
    %360 = vmatprep.subr.bf16.mxu0 0
    %361 = vmatpush2.bf16.msra.mxu0 0
    %362 = vmatprep.subr.bf16.mxu0 0
    %363 = vmatpush2.bf16.msra.mxu0 0
    %364 = vmatprep.subr.bf16.mxu0 0
    %365 = vmatpush2.bf16.msra.mxu0 0
    %366 = vmatprep.subr.bf16.mxu0 0
    %367 = vmatpush2.bf16.msra.mxu0 0
    %368 = vmatprep.subr.bf16.mxu0 0
    %369 = vmatpush2.bf16.msra.mxu0 0
    %370 = vmatprep.subr.bf16.mxu0 0
    %371 = vmatpush2.bf16.msra.mxu0 0
    %372 = vmatprep.mubr.bf16.mxu0 0
    %373 = vmatmul.mubr.bf16.gmra.mxu0 %v290
    %v374 = vpop.f32.mrf.mxu0
    %v375 = vadd.f32 %v283, %v374
    %v376 = vpop.f32.mrf.mxu0
    %v377 = vpop.f32.mrf.mxu0
    %v378 = vpop.f32.mrf.mxu0
    %379 = vdwg.mxu0
    %380 = vst [vmem:[#allocation2] sm:$0x3] %v375
    // Predicated region
    $region18: #{temp_forward.1} parent=1 // pred_check
      _
    $region19: #{temp_forward.1} parent=1 // pred_check_branch
      %382 = sbr.rel (0) target = $region21
    $region20: #{temp_forward.1} parent=1 // pred_region
      %s384 = ssub.s32 32, 32
      %385 = vsyncadd [#allocation3], %s384
      %s387 = sshll.u32 [#allocation2], 4
      %s388 = int_to_ptr.vmem [resolvable:$true] %s387
      %390 = dma.vmem_to_hbm [thread:$0]  %s388, 32, %s4, [#allocation3]
    $region21: #{temp_forward.1} parent=1 // pred_fallthru
      _
    // Predicated region
    $region22: #{temp_forward.1} parent=1 // pred_check
      _
    $region23: #{temp_forward.1} parent=1 // pred_check_branch
      %392 = sbr.rel (0) target = $region25
    $region24: #{temp_forward.1} parent=1 // pred_region
      %393 = dma.done [#allocation3], 32
    $region25: #{temp_forward.1} parent=1 // pred_fallthru
      _
    %394 = vsyncpa [#allocation3], 1

</llo_original>
